<compile_context>
chip_gen: v6e
topology: v6e:2x2x1
jax: 0.10.0
libtpu: 0.0.40
codegen_flags: <defaults>
</compile_context>

<pallas_src>
import functools

import jax
import jax.numpy as jnp
from jax.experimental import pallas as pl
from jax.experimental.pallas import tpu as pltpu

HIDDEN = 768
HEAD_DIMS = {"OCEMOTION": 7, "OCNLI": 3, "TNEWS": 15}
N_PAD = 128            # lane-dense padded output width (7 + 3 + 15 = 25 real columns)
MAX_SINGLE_TILE = 1024 # up to this many (8-padded) rows run as a single grid step
LARGE_BATCH_TILE = 512 # multiple of 8 and 128; used when B exceeds MAX_SINGLE_TILE


def _fused_cls_head_kernel(x_ref, w_ref, b_ref, o_ref):
    # x_ref: (tb, H) bf16 CLS tile; w_ref: (H, N_PAD) bf16; b_ref: (1, N_PAD) f32.
    acc = jnp.dot(x_ref[...], w_ref[...], preferred_element_type=jnp.float32)
    o_ref[...] = (acc + b_ref[...]).astype(o_ref.dtype)


def _invariant_spec(shape):
    """Grid-invariant BlockSpec; single-buffered when the jax version supports it."""
    index_map = lambda i: (0,) * len(shape)
    try:
        return pl.BlockSpec(shape, index_map, pipeline_mode=pl.Buffered(1))
    except TypeError:  # older BlockSpec signature without pipeline_mode
        return pl.BlockSpec(shape, index_map)


def fused_cls_heads(x_cls, w, b):
    """All-task logits: x_cls @ w + b with w/b lane-padded to N_PAD columns.

    x_cls: (B, H) bf16 (or f32) CLS embeddings.  Returns (B, N_PAD) f32 logits
    (padding columns equal the padded bias, i.e. 0).
    """
    B, H = x_cls.shape
    N = w.shape[1]

    # Tile selection: one grid step for small/medium batches, 512-row tiles otherwise.
    b_pad8 = pl.cdiv(B, 8) * 8
    tb = b_pad8 if b_pad8 <= MAX_SINGLE_TILE else LARGE_BATCH_TILE
    n_tiles = pl.cdiv(B, tb)
    Bp = n_tiles * tb
    if Bp != B:  # only pad when the batch is not already tile-aligned
        x_cls = jnp.pad(x_cls, ((0, Bp - B), (0, 0)))

    out = pl.pallas_call(
        _fused_cls_head_kernel,
        out_shape=jax.ShapeDtypeStruct((Bp, N), jnp.float32),
        grid=(n_tiles,),
        in_specs=[
            pl.BlockSpec((tb, H), lambda i: (i, 0)),  # only CLS rows reach VMEM
            _invariant_spec((H, N)),                  # fused head weight, DMA'd once
            _invariant_spec((1, N)),                  # fused bias (2D for VMEM layout)
        ],
        out_specs=pl.BlockSpec((tb, N), lambda i: (i, 0)),
        compiler_params=pltpu.CompilerParams(
            dimension_semantics=("parallel",),        # batch tiles are independent
        ),
    )(x_cls, w, b.reshape(1, N))

    if Bp != B:
        out = out[:B]
    return out


@jax.jit
def _forward_all_logits(hidden_states, w_bf16, b_f32):
    # CLS slice + bf16 cast fuse into the copy feeding the kernel under this jit.
    x_cls = hidden_states[:, 0, :].astype(jnp.bfloat16)
    return fused_cls_heads(x_cls, w_bf16, b_f32)


class ChineseRobertaLinearPallas:
    """Pallas port of ChineseRobertaLinear's own forward compute (CLS slice + task head)."""

    def __init__(self, key):
        keys = jax.random.split(key, 2 * len(HEAD_DIMS))
        bound = 1.0 / (HIDDEN ** 0.5)  # torch nn.Linear default init range
        w_full = jnp.zeros((HIDDEN, N_PAD), jnp.float32)
        b_full = jnp.zeros((N_PAD,), jnp.float32)
        self.col_slices = {}
        self.per_task_params = {}  # unfused f32 copies, kept for reference checks
        off = 0
        for i, (task, n_out) in enumerate(HEAD_DIMS.items()):
            kw, kb = keys[2 * i], keys[2 * i + 1]
            w = jax.random.uniform(kw, (HIDDEN, n_out), jnp.float32, -bound, bound)
            bias = jax.random.uniform(kb, (n_out,), jnp.float32, -bound, bound)
            w_full = w_full.at[:, off:off + n_out].set(w)
            b_full = b_full.at[off:off + n_out].set(bias)
            self.col_slices[task] = (off, n_out)
            self.per_task_params[task] = (w, bias)
            off += n_out
        # bf16 weights for the kernel (halves the dominant HBM traffic); f32 bias.
        self.w_fused = w_full.astype(jnp.bfloat16)
        self.b_fused = b_full  # stays f32: bias add happens on the f32 accumulator

    def __call__(self, task_type, hidden_states):
        if task_type not in self.col_slices:
            raise ValueError("Unknown task type for " + task_type)
        logits_all = _forward_all_logits(hidden_states, self.w_fused, self.b_fused)
        off, n_out = self.col_slices[task_type]
        return logits_all[:, off:off + n_out]


if __name__ == "__main__":
    key = jax.random.PRNGKey(0)
    k_model, k_x1, k_x2 = jax.random.split(key, 3)
    model = ChineseRobertaLinearPallas(k_model)

    S, H = 8, HIDDEN
    # Stand-in for BertModel(*inputs)[0] hidden states, at two small batch sizes
    # (B=2 exercises the ragged/pad path, B=16 the tile-aligned path).
    for B, kx in ((2, k_x1), (16, k_x2)):
        x = jax.random.normal(kx, (B, S, H), jnp.float32)
        for task in ("OCEMOTION", "OCNLI", "TNEWS"):
            out = jax.block_until_ready(model(task, x))
            # pure-JAX f32 reference against the unfused per-task parameters;
            # tolerance relaxed for the bf16-input / f32-accumulate MXU path.
            w, b = model.per_task_params[task]
            ref = x[:, 0, :] @ w + b
            assert out.shape == (B, HEAD_DIMS[task]), out.shape
            assert jnp.allclose(out, ref, atol=2e-2, rtol=0.0), (
                task, float(jnp.max(jnp.abs(out - ref))))

    print("KERNEL_OK")
</pallas_src>

<mosaic_0001>
module attributes {stable_mosaic.version = 11 : i64} {
  func.func @_fused_cls_head_kernel(%arg0: i32, %arg1: memref<8x768xbf16, #tpu.memory_space<vmem>>, %arg2: memref<768x128xbf16, #tpu.memory_space<vmem>>, %arg3: memref<1x128xf32, #tpu.memory_space<vmem>>, %arg4: memref<8x128xf32, #tpu.memory_space<vmem>>) attributes {dimension_semantics = [#tpu.dimension_semantics<parallel>], iteration_bounds = array<i64: 1>, scalar_prefetch = 0 : i64, scratch_operands = 0 : i64, tpu.core_type = #tpu.core_type<tc>, window_params = [{transform_indices = @transform_0, window_bounds = array<i64: 8, 768>}, {pipeline_mode = #tpu.pipeline_mode<synchronous>, transform_indices = @transform_1, window_bounds = array<i64: 768, 128>}, {pipeline_mode = #tpu.pipeline_mode<synchronous>, transform_indices = @transform_2, window_bounds = array<i64: 1, 128>}, {transform_indices = @transform_3, window_bounds = array<i64: 8, 128>}]} {
    %c0 = arith.constant 0 : index
    %c0_0 = arith.constant 0 : index
    %0 = vector.load %arg1[%c0, %c0_0] : memref<8x768xbf16, #tpu.memory_space<vmem>>, vector<8x768xbf16>
    %c0_1 = arith.constant 0 : index
    %c0_2 = arith.constant 0 : index
    %1 = vector.load %arg2[%c0_1, %c0_2] : memref<768x128xbf16, #tpu.memory_space<vmem>>, vector<768x128xbf16>
    %cst = arith.constant dense<0.000000e+00> : vector<8x128xf32>
    %2 = tpu.matmul %0, %1, %cst {dimension_numbers = #tpu.dot_dimension_numbers<[1], [0], [0], [1], [0, 0, 1, 1], [], []>} : vector<8x768xbf16>, vector<768x128xbf16>, vector<8x128xf32> -> vector<8x128xf32>
    %c0_3 = arith.constant 0 : index
    %c0_4 = arith.constant 0 : index
    %3 = vector.load %arg3[%c0_3, %c0_4] : memref<1x128xf32, #tpu.memory_space<vmem>>, vector<1x128xf32>
    %4 = vector.broadcast %3 : vector<1x128xf32> to vector<8x128xf32>
    %5 = arith.addf %2, %4 : vector<8x128xf32>
    %c0_5 = arith.constant 0 : index
    %c0_6 = arith.constant 0 : index
    %6 = vector.load %arg4[%c0_5, %c0_6] : memref<8x128xf32, #tpu.memory_space<vmem>>, vector<8x128xf32>
    tpu.vector_store %arg4[%c0_5, %c0_6], %5 {strides = array<i32>} : memref<8x128xf32, #tpu.memory_space<vmem>>, vector<8x128xf32>,
    return
  }
  func.func @transform_0(%arg0: i32) -> (i32, i32) {
    %c0_i32 = arith.constant 0 : i32
    %c0_i32_0 = arith.constant 0 : i32
    return %arg0, %c0_i32 : i32, i32
  }
  func.func @transform_1(%arg0: i32) -> (i32, i32) {
    %c0_i32 = arith.constant 0 : i32
    %c0_i32_0 = arith.constant 0 : i32
    %c0_i32_1 = arith.constant 0 : i32
    return %c0_i32, %c0_i32_0 : i32, i32
  }
  func.func @transform_2(%arg0: i32) -> (i32, i32) {
    %c0_i32 = arith.constant 0 : i32
    %c0_i32_0 = arith.constant 0 : i32
    %c0_i32_1 = arith.constant 0 : i32
    return %c0_i32, %c0_i32_0 : i32, i32
  }
  func.func @transform_3(%arg0: i32) -> (i32, i32) {
    %c0_i32 = arith.constant 0 : i32
    %c0_i32_0 = arith.constant 0 : i32
    return %arg0, %c0_i32 : i32, i32
  }
}

</mosaic_0001>

<llo_original>
// kernel: _forward_all_logits.1
$region0: #{_forward_all_logits.1}
  #allocation0 [shape = 'u32[]', space=smem, size = 0x4, offset = 0x4, fixed_abs, tag = 'smem constant byte address 0x4 - core index']
  #allocation1 [shape = 'u32[144,128]{1,0:T(1,128)}', space=vmem, size = 0x12000, scoped, tag = 'internal scratch']
  %s0 = inlined_call_operand.vmem [shape: bf16[8,768], index: 0, kind: input, shape index: {}]
  %s1 = inlined_call_operand.hbm [shape: bf16[768,128], index: 1, kind: input, shape index: {}]
  %s2 = inlined_call_operand.vmem [shape: f32[1,128], index: 2, kind: input, shape index: {}]
  %s3 = inlined_call_operand.vmem [shape: f32[8,128], index: 3, kind: output, shape index: {}]
  %s4 = sld [smem:[#allocation0]]
  $region26: #{_forward_all_logits.1} parent=0
    _
  %s6 = ssub.s32 1, %s4
  %s7 = scalar_select 0, %s6, %s4
  $region1: #{_forward_all_logits.1} parent=0
    #allocation2 [shape = 'u8[196608]{0}', space=vmem, size = 0x30000, scoped, tag = 'input window, operand 1, single buffered']
    #allocation3 [shape = 's32[1]{0}', space=sflag, size = 0x4, scoped, tag = 'scoped memory for _forward_all_logits.1']
    %8 = vsyncpa [#allocation3], 0
    // Predicated region
    $region2: #{_forward_all_logits.1} parent=1 // pred_check
      _
    $region3: #{_forward_all_logits.1} parent=1 // pred_check_branch
      %10 = sbr.rel (0) target = $region5
    $region4: #{_forward_all_logits.1} parent=1 // pred_region
      _
    $region5: #{_forward_all_logits.1} parent=1 // pred_fallthru
      _
    // Predicated region
    $region6: #{_forward_all_logits.1} parent=1 // pred_check
      _
    $region7: #{_forward_all_logits.1} parent=1 // pred_check_branch
      %12 = sbr.rel (0) target = $region9
    $region8: #{_forward_all_logits.1} parent=1 // pred_region
      %s14 = ssub.s32 6144, 6144
      %15 = vsyncadd [#allocation3], %s14
      %s16 = sshll.u32 [#allocation2], 4
      %s17 = int_to_ptr.vmem [resolvable:$true] %s16
      %22 = dma.hbm_to_vmem [thread:$0]  %s1, 6144, %s17, [#allocation3], 64, 64, 4
    $region9: #{_forward_all_logits.1} parent=1 // pred_fallthru
      _
    // Predicated region
    $region10: #{_forward_all_logits.1} parent=1 // pred_check
      _
    $region11: #{_forward_all_logits.1} parent=1 // pred_check_branch
      %24 = sbr.rel (0) target = $region13
    $region12: #{_forward_all_logits.1} parent=1 // pred_region
      _
    $region13: #{_forward_all_logits.1} parent=1 // pred_fallthru
      _
    // Predicated region
    $region14: #{_forward_all_logits.1} parent=1 // pred_check
      _
    $region15: #{_forward_all_logits.1} parent=1 // pred_check_branch
      %26 = sbr.rel (0) target = $region17
    $region16: #{_forward_all_logits.1} parent=1 // pred_region
      %27 = dma.done [#allocation3], 6144
    $region17: #{_forward_all_logits.1} parent=1 // pred_fallthru
      _
    %v29 = vld [vmem:[%s0] sm:$0xff]
    %v30 = vld [vmem:[%s0 + $0x8] sm:$0xff]
    %v31 = vld [vmem:[%s0 + $0x10] sm:$0xff]
    %v32 = vld [vmem:[#allocation2] sm:$0xf]
    %v33 = vld [vmem:[#allocation2 + $0x4] sm:$0xf]
    %v34 = vld [vmem:[#allocation2 + $0x8] sm:$0xf]
    %v35 = vld [vmem:[#allocation2 + $0xc] sm:$0xf]
    %v36 = vld [vmem:[#allocation2 + $0x10] sm:$0xf]
    %v37 = vld [vmem:[#allocation2 + $0x14] sm:$0xf]
    %v38 = vld [vmem:[#allocation2 + $0x18] sm:$0xf]
    %v39 = vld [vmem:[#allocation2 + $0x1c] sm:$0xf]
    %v40 = vld [vmem:[#allocation2 + $0x20] sm:$0xf]
    %v41 = vld [vmem:[#allocation2 + $0x24] sm:$0xf]
    %v42 = vld [vmem:[#allocation2 + $0x28] sm:$0xf]
    %v43 = vld [vmem:[#allocation2 + $0x2c] sm:$0xf]
    %v44 = vld [vmem:[#allocation2 + $0x30] sm:$0xf]
    %v45 = vld [vmem:[#allocation2 + $0x34] sm:$0xf]
    %v46 = vld [vmem:[#allocation2 + $0x38] sm:$0xf]
    %v47 = vld [vmem:[#allocation2 + $0x3c] sm:$0xf]
    %v48 = vld [vmem:[#allocation2 + $0x40] sm:$0xf]
    %v49 = vld [vmem:[#allocation2 + $0x44] sm:$0xf]
    %v50 = vld [vmem:[#allocation2 + $0x48] sm:$0xf]
    %v51 = vld [vmem:[#allocation2 + $0x4c] sm:$0xf]
    %v52 = vld [vmem:[#allocation2 + $0x50] sm:$0xf]
    %v53 = vld [vmem:[#allocation2 + $0x54] sm:$0xf]
    %v54 = vld [vmem:[#allocation2 + $0x58] sm:$0xf]
    %v55 = vld [vmem:[#allocation2 + $0x5c] sm:$0xf]
    %v56 = vld [vmem:[#allocation2 + $0x60] sm:$0xf]
    %v57 = vld [vmem:[#allocation2 + $0x64] sm:$0xf]
    %v58 = vld [vmem:[#allocation2 + $0x68] sm:$0xf]
    %v59 = vld [vmem:[#allocation2 + $0x6c] sm:$0xf]
    %v60 = vld [vmem:[#allocation2 + $0x70] sm:$0xf]
    %v61 = vld [vmem:[#allocation2 + $0x74] sm:$0xf]
    %v62 = vld [vmem:[#allocation2 + $0x78] sm:$0xf]
    %v63 = vld [vmem:[#allocation2 + $0x7c] sm:$0xf]
    %v64 = vld [vmem:[#allocation2 + $0x80] sm:$0xf]
    %v65 = vld [vmem:[#allocation2 + $0x84] sm:$0xf]
    %v66 = vld [vmem:[#allocation2 + $0x88] sm:$0xf]
    %v67 = vld [vmem:[#allocation2 + $0x8c] sm:$0xf]
    %v68 = vld [vmem:[#allocation2 + $0x90] sm:$0xf]
    %v69 = vld [vmem:[#allocation2 + $0x94] sm:$0xf]
    %v70 = vld [vmem:[#allocation2 + $0x98] sm:$0xf]
    %v71 = vld [vmem:[#allocation2 + $0x9c] sm:$0xf]
    %v72 = vld [vmem:[#allocation2 + $0xa0] sm:$0xf]
    %v73 = vld [vmem:[#allocation2 + $0xa4] sm:$0xf]
    %v74 = vld [vmem:[#allocation2 + $0xa8] sm:$0xf]
    %v75 = vld [vmem:[#allocation2 + $0xac] sm:$0xf]
    %v76 = vld [vmem:[#allocation2 + $0xb0] sm:$0xf]
    %v77 = vld [vmem:[#allocation2 + $0xb4] sm:$0xf]
    %v78 = vld [vmem:[#allocation2 + $0xb8] sm:$0xf]
    %v79 = vld [vmem:[#allocation2 + $0xbc] sm:$0xf]
    %v80 = vld [vmem:[#allocation2 + $0xc0] sm:$0xf]
    %v81 = vld [vmem:[#allocation2 + $0xc4] sm:$0xf]
    %v82 = vld [vmem:[#allocation2 + $0xc8] sm:$0xf]
    %v83 = vld [vmem:[#allocation2 + $0xcc] sm:$0xf]
    %v84 = vld [vmem:[#allocation2 + $0xd0] sm:$0xf]
    %v85 = vld [vmem:[#allocation2 + $0xd4] sm:$0xf]
    %v86 = vld [vmem:[#allocation2 + $0xd8] sm:$0xf]
    %v87 = vld [vmem:[#allocation2 + $0xdc] sm:$0xf]
    %v88 = vld [vmem:[#allocation2 + $0xe0] sm:$0xf]
    %v89 = vld [vmem:[#allocation2 + $0xe4] sm:$0xf]
    %v90 = vld [vmem:[#allocation2 + $0xe8] sm:$0xf]
    %v91 = vld [vmem:[#allocation2 + $0xec] sm:$0xf]
    %v92 = vld [vmem:[#allocation2 + $0xf0] sm:$0xf]
    %v93 = vld [vmem:[#allocation2 + $0xf4] sm:$0xf]
    %v94 = vld [vmem:[#allocation2 + $0xf8] sm:$0xf]
    %v95 = vld [vmem:[#allocation2 + $0xfc] sm:$0xf]
    %v96 = vld [vmem:[#allocation2 + $0x100] sm:$0xf]
    %v97 = vld [vmem:[#allocation2 + $0x104] sm:$0xf]
    %v98 = vld [vmem:[#allocation2 + $0x108] sm:$0xf]
    %v99 = vld [vmem:[#allocation2 + $0x10c] sm:$0xf]
    %v100 = vld [vmem:[#allocation2 + $0x110] sm:$0xf]
    %v101 = vld [vmem:[#allocation2 + $0x114] sm:$0xf]
    %v102 = vld [vmem:[#allocation2 + $0x118] sm:$0xf]
    %v103 = vld [vmem:[#allocation2 + $0x11c] sm:$0xf]
    %v104 = vld [vmem:[#allocation2 + $0x120] sm:$0xf]
    %v105 = vld [vmem:[#allocation2 + $0x124] sm:$0xf]
    %v106 = vld [vmem:[#allocation2 + $0x128] sm:$0xf]
    %v107 = vld [vmem:[#allocation2 + $0x12c] sm:$0xf]
    %v108 = vld [vmem:[#allocation2 + $0x130] sm:$0xf]
    %v109 = vld [vmem:[#allocation2 + $0x134] sm:$0xf]
    %v110 = vld [vmem:[#allocation2 + $0x138] sm:$0xf]
    %v111 = vld [vmem:[#allocation2 + $0x13c] sm:$0xf]
    %v112 = vld [vmem:[#allocation2 + $0x140] sm:$0xf]
    %v113 = vld [vmem:[#allocation2 + $0x144] sm:$0xf]
    %v114 = vld [vmem:[#allocation2 + $0x148] sm:$0xf]
    %v115 = vld [vmem:[#allocation2 + $0x14c] sm:$0xf]
    %v116 = vld [vmem:[#allocation2 + $0x150] sm:$0xf]
    %v117 = vld [vmem:[#allocation2 + $0x154] sm:$0xf]
    %v118 = vld [vmem:[#allocation2 + $0x158] sm:$0xf]
    %v119 = vld [vmem:[#allocation2 + $0x15c] sm:$0xf]
    %v120 = vld [vmem:[#allocation2 + $0x160] sm:$0xf]
    %v121 = vld [vmem:[#allocation2 + $0x164] sm:$0xf]
    %v122 = vld [vmem:[#allocation2 + $0x168] sm:$0xf]
    %v123 = vld [vmem:[#allocation2 + $0x16c] sm:$0xf]
    %v124 = vld [vmem:[#allocation2 + $0x170] sm:$0xf]
    %v125 = vld [vmem:[#allocation2 + $0x174] sm:$0xf]
    %v126 = vld [vmem:[#allocation2 + $0x178] sm:$0xf]
    %v127 = vld [vmem:[#allocation2 + $0x17c] sm:$0xf]
    %v128 = vld [vmem:[%s2] sm:$0x1]
    %v130 = vlaneseq
    %v131 = vshrl.u32 %v130, 7
    %v132 = vsub.s32 0, %v131
    %v133 = vrot.slane %v128, %v132
    %v138 = vunpack.c.l.b16 %v29
    %v139 = vunpack.c.h.b16 %v29
    %v140 = vunpack.c.l.b16 %v30
    %v141 = vunpack.c.h.b16 %v30
    %v142 = vunpack.c.l.b16 %v31
    %v143 = vunpack.c.h.b16 %v31
    %v144 = vpack.c.b16 %v138, %v138
    %v145 = vpack.c.b16 %v139, %v139
    %v146 = vpack.c.b16 %v140, %v140
    %v147 = vpack.c.b16 %v141, %v141
    %v148 = vpack.c.b16 %v142, %v142
    %v149 = vpack.c.b16 %v143, %v143
    %v252 = vunpack.c.l.b16 %v32
    %v253 = vunpack.c.l.b16 %v33
    %v254 = vunpack.c.l.b16 %v34
    %v255 = vunpack.c.l.b16 %v35
    %v256 = vunpack.c.l.b16 %v36
    %v257 = vunpack.c.l.b16 %v37
    %v258 = vunpack.c.l.b16 %v38
    %v259 = vunpack.c.l.b16 %v39
    %v260 = vunpack.c.l.b16 %v40
    %v261 = vunpack.c.l.b16 %v41
    %v262 = vunpack.c.l.b16 %v42
    %v263 = vunpack.c.l.b16 %v43
    %v264 = vunpack.c.l.b16 %v44
    %v265 = vunpack.c.l.b16 %v45
    %v266 = vunpack.c.l.b16 %v46
    %v267 = vunpack.c.l.b16 %v47
    %v268 = vunpack.c.l.b16 %v48
    %v269 = vunpack.c.l.b16 %v49
    %v270 = vunpack.c.l.b16 %v50
    %v271 = vunpack.c.l.b16 %v51
    %v272 = vunpack.c.l.b16 %v52
    %v273 = vunpack.c.l.b16 %v53
    %v274 = vunpack.c.l.b16 %v54
    %v275 = vunpack.c.l.b16 %v55
    %v276 = vunpack.c.l.b16 %v56
    %v277 = vunpack.c.l.b16 %v57
    %v278 = vunpack.c.l.b16 %v58
    %v279 = vunpack.c.l.b16 %v59
    %v280 = vunpack.c.l.b16 %v60
    %v281 = vunpack.c.l.b16 %v61
    %v282 = vunpack.c.l.b16 %v62
    %v283 = vunpack.c.l.b16 %v63
    %v284 = vunpack.c.l.b16 %v64
    %v285 = vunpack.c.l.b16 %v65
    %v286 = vunpack.c.l.b16 %v66
    %v287 = vunpack.c.l.b16 %v67
    %v288 = vunpack.c.l.b16 %v68
    %v289 = vunpack.c.l.b16 %v69
    %v290 = vunpack.c.l.b16 %v70
    %v291 = vunpack.c.l.b16 %v71
    %v292 = vunpack.c.l.b16 %v72
    %v293 = vunpack.c.l.b16 %v73
    %v294 = vunpack.c.l.b16 %v74
    %v295 = vunpack.c.l.b16 %v75
    %v296 = vunpack.c.l.b16 %v76
    %v297 = vunpack.c.l.b16 %v77
    %v298 = vunpack.c.l.b16 %v78
    %v299 = vunpack.c.l.b16 %v79
    %v300 = vunpack.c.l.b16 %v80
    %v301 = vunpack.c.l.b16 %v81
    %v302 = vunpack.c.l.b16 %v82
    %v303 = vunpack.c.l.b16 %v83
    %v304 = vunpack.c.l.b16 %v84
    %v305 = vunpack.c.l.b16 %v85
    %v306 = vunpack.c.l.b16 %v86
    %v307 = vunpack.c.l.b16 %v87
    %v308 = vunpack.c.l.b16 %v88
    %v309 = vunpack.c.l.b16 %v89
    %v310 = vunpack.c.l.b16 %v90
    %v311 = vunpack.c.l.b16 %v91
    %v312 = vunpack.c.l.b16 %v92
    %v313 = vunpack.c.l.b16 %v93
    %v314 = vunpack.c.l.b16 %v94
    %v315 = vunpack.c.l.b16 %v95
    %v316 = vunpack.c.l.b16 %v96
    %v317 = vunpack.c.l.b16 %v97
    %v318 = vunpack.c.l.b16 %v98
    %v319 = vunpack.c.l.b16 %v99
    %v320 = vunpack.c.l.b16 %v100
    %v321 = vunpack.c.l.b16 %v101
    %v322 = vunpack.c.l.b16 %v102
    %v323 = vunpack.c.l.b16 %v103
    %v324 = vunpack.c.l.b16 %v104
    %v325 = vunpack.c.l.b16 %v105
    %v326 = vunpack.c.l.b16 %v106
    %v327 = vunpack.c.l.b16 %v107
    %v328 = vunpack.c.l.b16 %v108
    %v329 = vunpack.c.l.b16 %v109
    %v330 = vunpack.c.l.b16 %v110
    %v331 = vunpack.c.l.b16 %v111
    %v332 = vunpack.c.l.b16 %v112
    %v333 = vunpack.c.l.b16 %v113
    %v334 = vunpack.c.l.b16 %v114
    %v335 = vunpack.c.l.b16 %v115
    %v336 = vunpack.c.l.b16 %v116
    %v337 = vunpack.c.l.b16 %v117
    %v338 = vunpack.c.l.b16 %v118
    %v339 = vunpack.c.l.b16 %v119
    %v340 = vunpack.c.l.b16 %v120
    %v341 = vunpack.c.l.b16 %v121
    %v342 = vunpack.c.l.b16 %v122
    %v343 = vunpack.c.l.b16 %v123
    %v344 = vunpack.c.l.b16 %v124
    %v345 = vunpack.c.l.b16 %v125
    %v346 = vunpack.c.l.b16 %v126
    %v347 = vunpack.c.l.b16 %v127
    %v348 = vpack.c.b16 %v253, %v252
    %v349 = vpack.c.b16 %v255, %v254
    %v350 = vpack.c.b16 %v257, %v256
    %v351 = vpack.c.b16 %v259, %v258
    %v352 = vpack.c.b16 %v261, %v260
    %v353 = vpack.c.b16 %v263, %v262
    %v354 = vpack.c.b16 %v265, %v264
    %v355 = vpack.c.b16 %v267, %v266
    %v356 = vpack.c.b16 %v269, %v268
    %v357 = vpack.c.b16 %v271, %v270
    %v358 = vpack.c.b16 %v273, %v272
    %v359 = vpack.c.b16 %v275, %v274
    %v360 = vpack.c.b16 %v277, %v276
    %v361 = vpack.c.b16 %v279, %v278
    %v362 = vpack.c.b16 %v281, %v280
    %v363 = vpack.c.b16 %v283, %v282
    %v364 = vpack.c.b16 %v285, %v284
    %v365 = vpack.c.b16 %v287, %v286
    %v366 = vpack.c.b16 %v289, %v288
    %v367 = vpack.c.b16 %v291, %v290
    %v368 = vpack.c.b16 %v293, %v292
    %v369 = vpack.c.b16 %v295, %v294
    %v370 = vpack.c.b16 %v297, %v296
    %v371 = vpack.c.b16 %v299, %v298
    %v372 = vpack.c.b16 %v301, %v300
    %v373 = vpack.c.b16 %v303, %v302
    %v374 = vpack.c.b16 %v305, %v304
    %v375 = vpack.c.b16 %v307, %v306
    %v376 = vpack.c.b16 %v309, %v308
    %v377 = vpack.c.b16 %v311, %v310
    %v378 = vpack.c.b16 %v313, %v312
    %v379 = vpack.c.b16 %v315, %v314
    %v380 = vpack.c.b16 %v317, %v316
    %v381 = vpack.c.b16 %v319, %v318
    %v382 = vpack.c.b16 %v321, %v320
    %v383 = vpack.c.b16 %v323, %v322
    %v384 = vpack.c.b16 %v325, %v324
    %v385 = vpack.c.b16 %v327, %v326
    %v386 = vpack.c.b16 %v329, %v328
    %v387 = vpack.c.b16 %v331, %v330
    %v388 = vpack.c.b16 %v333, %v332
    %v389 = vpack.c.b16 %v335, %v334
    %v390 = vpack.c.b16 %v337, %v336
    %v391 = vpack.c.b16 %v339, %v338
    %v392 = vpack.c.b16 %v341, %v340
    %v393 = vpack.c.b16 %v343, %v342
    %v394 = vpack.c.b16 %v345, %v344
    %v395 = vpack.c.b16 %v347, %v346
    %444 = vmatprep.subr.bf16.mxu0 0
    %445 = vmatpush1.bf16.msra.mxu0 %v355
    %446 = vmatprep.subr.bf16.mxu0 0
    %447 = vmatpush1.bf16.msra.mxu0 %v354
    %448 = vmatprep.subr.bf16.mxu0 0
    %449 = vmatpush1.bf16.msra.mxu0 %v353
    %450 = vmatprep.subr.bf16.mxu0 0
    %451 = vmatpush1.bf16.msra.mxu0 %v352
    %452 = vmatprep.subr.bf16.mxu0 0
    %453 = vmatpush1.bf16.msra.mxu0 %v351
    %454 = vmatprep.subr.bf16.mxu0 0
    %455 = vmatpush1.bf16.msra.mxu0 %v350
    %456 = vmatprep.subr.bf16.mxu0 0
    %457 = vmatpush1.bf16.msra.mxu0 %v349
    %458 = vmatprep.subr.bf16.mxu0 0
    %459 = vmatpush1.bf16.msra.mxu0 %v348
    %460 = vmatprep.subr.bf16.mxu0 0
    %461 = vmatpush2.bf16.msra.mxu0 %v363
    %462 = vmatprep.subr.bf16.mxu0 0
    %463 = vmatpush2.bf16.msra.mxu0 %v362
    %464 = vmatprep.subr.bf16.mxu0 0
    %465 = vmatpush2.bf16.msra.mxu0 %v361
    %466 = vmatprep.subr.bf16.mxu0 0
    %467 = vmatpush2.bf16.msra.mxu0 %v360
    %468 = vmatprep.subr.bf16.mxu0 0
    %469 = vmatpush2.bf16.msra.mxu0 %v359
    %470 = vmatprep.subr.bf16.mxu0 0
    %471 = vmatpush2.bf16.msra.mxu0 %v358
    %472 = vmatprep.subr.bf16.mxu0 0
    %473 = vmatpush2.bf16.msra.mxu0 %v357
    %474 = vmatprep.subr.bf16.mxu0 0
    %475 = vmatpush2.bf16.msra.mxu0 %v356
    %476 = vmatprep.mubr.bf16.mxu0 %v145
    %477 = vmatmul.mubr.bf16.gmra.mxu0 %v144
    %v478 = vpop.f32.mrf.mxu0
    %v479 = vadd.f32 %v133, %v478
    %v480 = vpop.f32.mrf.mxu0
    %v481 = vpop.f32.mrf.mxu0
    %v482 = vpop.f32.mrf.mxu0
    %483 = vdwg.mxu0
    %484 = vmatprep.subr.bf16.mxu0 0
    %485 = vmatpush1.bf16.msra.mxu0 %v371
    %486 = vmatprep.subr.bf16.mxu0 0
    %487 = vmatpush1.bf16.msra.mxu0 %v370
    %488 = vmatprep.subr.bf16.mxu0 0
    %489 = vmatpush1.bf16.msra.mxu0 %v369
    %490 = vmatprep.subr.bf16.mxu0 0
    %491 = vmatpush1.bf16.msra.mxu0 %v368
    %492 = vmatprep.subr.bf16.mxu0 0
    %493 = vmatpush1.bf16.msra.mxu0 %v367
    %494 = vmatprep.subr.bf16.mxu0 0
    %495 = vmatpush1.bf16.msra.mxu0 %v366
    %496 = vmatprep.subr.bf16.mxu0 0
    %497 = vmatpush1.bf16.msra.mxu0 %v365
    %498 = vmatprep.subr.bf16.mxu0 0
    %499 = vmatpush1.bf16.msra.mxu0 %v364
    %500 = vmatprep.subr.bf16.mxu0 0
    %501 = vmatpush2.bf16.msra.mxu0 %v379
    %502 = vmatprep.subr.bf16.mxu0 0
    %503 = vmatpush2.bf16.msra.mxu0 %v378
    %504 = vmatprep.subr.bf16.mxu0 0
    %505 = vmatpush2.bf16.msra.mxu0 %v377
    %506 = vmatprep.subr.bf16.mxu0 0
    %507 = vmatpush2.bf16.msra.mxu0 %v376
    %508 = vmatprep.subr.bf16.mxu0 0
    %509 = vmatpush2.bf16.msra.mxu0 %v375
    %510 = vmatprep.subr.bf16.mxu0 0
    %511 = vmatpush2.bf16.msra.mxu0 %v374
    %512 = vmatprep.subr.bf16.mxu0 0
    %513 = vmatpush2.bf16.msra.mxu0 %v373
    %514 = vmatprep.subr.bf16.mxu0 0
    %515 = vmatpush2.bf16.msra.mxu0 %v372
    %516 = vmatprep.mubr.bf16.mxu0 %v147
    %517 = vmatmul.mubr.bf16.gmra.mxu0 %v146
    %v518 = vpop.f32.mrf.mxu0
    %v519 = vadd.f32 %v479, %v518
    %v520 = vpop.f32.mrf.mxu0
    %v521 = vpop.f32.mrf.mxu0
    %v522 = vpop.f32.mrf.mxu0
    %523 = vdwg.mxu0
    %524 = vmatprep.subr.bf16.mxu0 0
    %525 = vmatpush1.bf16.msra.mxu0 %v387
    %526 = vmatprep.subr.bf16.mxu0 0
    %527 = vmatpush1.bf16.msra.mxu0 %v386
    %528 = vmatprep.subr.bf16.mxu0 0
    %529 = vmatpush1.bf16.msra.mxu0 %v385
    %530 = vmatprep.subr.bf16.mxu0 0
    %531 = vmatpush1.bf16.msra.mxu0 %v384
    %532 = vmatprep.subr.bf16.mxu0 0
    %533 = vmatpush1.bf16.msra.mxu0 %v383
    %534 = vmatprep.subr.bf16.mxu0 0
    %535 = vmatpush1.bf16.msra.mxu0 %v382
    %536 = vmatprep.subr.bf16.mxu0 0
    %537 = vmatpush1.bf16.msra.mxu0 %v381
    %538 = vmatprep.subr.bf16.mxu0 0
    %539 = vmatpush1.bf16.msra.mxu0 %v380
    %540 = vmatprep.subr.bf16.mxu0 0
    %541 = vmatpush2.bf16.msra.mxu0 %v395
    %542 = vmatprep.subr.bf16.mxu0 0
    %543 = vmatpush2.bf16.msra.mxu0 %v394
    %544 = vmatprep.subr.bf16.mxu0 0
    %545 = vmatpush2.bf16.msra.mxu0 %v393
    %546 = vmatprep.subr.bf16.mxu0 0
    %547 = vmatpush2.bf16.msra.mxu0 %v392
    %548 = vmatprep.subr.bf16.mxu0 0
    %549 = vmatpush2.bf16.msra.mxu0 %v391
    %550 = vmatprep.subr.bf16.mxu0 0
    %551 = vmatpush2.bf16.msra.mxu0 %v390
    %552 = vmatprep.subr.bf16.mxu0 0
    %553 = vmatpush2.bf16.msra.mxu0 %v389
    %554 = vmatprep.subr.bf16.mxu0 0
    %555 = vmatpush2.bf16.msra.mxu0 %v388
    %556 = vmatprep.mubr.bf16.mxu0 %v149
    %557 = vmatmul.mubr.bf16.gmra.mxu0 %v148
    %v558 = vpop.f32.mrf.mxu0
    %v559 = vadd.f32 %v519, %v558
    %v560 = vpop.f32.mrf.mxu0
    %v561 = vpop.f32.mrf.mxu0
    %v562 = vpop.f32.mrf.mxu0
    %563 = vdwg.mxu0
    %564 = vst [vmem:[%s3] sm:$0xff] %v559
    // Predicated region
    $region18: #{_forward_all_logits.1} parent=1 // pred_check
      _
    $region19: #{_forward_all_logits.1} parent=1 // pred_check_branch
      %566 = sbr.rel (0) target = $region21
    $region20: #{_forward_all_logits.1} parent=1 // pred_region
      _
    $region21: #{_forward_all_logits.1} parent=1 // pred_fallthru
      _
    // Predicated region
    $region22: #{_forward_all_logits.1} parent=1 // pred_check
      _
    $region23: #{_forward_all_logits.1} parent=1 // pred_check_branch
      %568 = sbr.rel (0) target = $region25
    $region24: #{_forward_all_logits.1} parent=1 // pred_region
      _
    $region25: #{_forward_all_logits.1} parent=1 // pred_fallthru
      _
    %569 = vsyncpa [#allocation3], 1

</llo_original>
